<compile_context>
chip_gen: v7x
topology: tpu7x:2x2x1
jax: 0.10.0
libtpu: 0.0.40
codegen_flags: <defaults>
</compile_context>

<pallas_src>
import functools

import jax
import jax.numpy as jnp
from jax.experimental import pallas as pl
from jax.experimental.pallas import tpu as pltpu


def st_gcn_kernel(x_ref, Mc_ref, sc_ref, Wt_ref, s2_ref, out_ref, *, T, Kt):
    """One row-block (a whole number of T-length samples).

    x_ref : (R, C_in*V)                 input rows (R = nb*T stacked (n,t) rows)
    Mc_ref: (C_in*V, 2*C_out*V)         [gcn o A o BN1-scale | residual o BNr-scale]
    sc_ref: (1, 2*C_out*V)              matching shifts (biases + BN shifts folded)
    Wt_ref: (Kt*C_out*V, C_out*V)       K-stacked temporal taps (kron, BN2-scaled)
    s2_ref: (1, C_out*V)                temporal-branch shift (bt + BN2 folded)
    out_ref:(R, C_out*V)
    """
    x = x_ref[...]
    R = x.shape[0]
    CV_out = Wt_ref.shape[1]
    pad = (Kt - 1) // 2

    # Fused matmul: gcn conv + graph contraction + BN1 scale || residual branch.
    h = jnp.dot(x, Mc_ref[...], preferred_element_type=jnp.float32)
    h = h + sc_ref[...]
    z = jnp.maximum(h[:, :CV_out], 0.0)      # BN1 + ReLU (shift already folded)
    res = h[:, CV_out:]                      # residual (conv bias + BN folded)

    # Temporal conv (+ BN2): build the Kt shifted/masked copies of z, stack
    # them along lanes and do ONE K-fused MXU matmul.
    # Rows are (n, t) with t fastest; the roll+mask trick is only valid because
    # R is an exact multiple of T (block never splits a sample mid-way).
    t_row = jax.lax.broadcasted_iota(jnp.int32, (R, 1), 0) % T   # hoisted
    taps = []
    for dt in range(Kt):
        off = dt - pad
        if off == 0:
            taps.append(z)
        else:
            zs = pltpu.roll(z, shift=(-off) % R, axis=0)          # XLU slot
            mask = ((t_row + off >= 0) & (t_row + off < T)).astype(jnp.float32)
            taps.append(zs * mask)                                # (R,1) bcast
    z_cat = jnp.concatenate(taps, axis=1)                         # (R, Kt*CV_out)
    acc = jnp.dot(z_cat, Wt_ref[...], preferred_element_type=jnp.float32)
    acc = acc + s2_ref[...]

    out_ref[...] = jnp.maximum(acc + res, 0.0).astype(out_ref.dtype)


def _fold_params(A, p, C_in, C_out, V, K, Kt):
    """Parameter-only folds, done once in the (jitted) wrapper."""
    eyeV = jnp.eye(V, dtype=jnp.float32)
    rep = lambda v: jnp.repeat(v.reshape(-1), V)        # (C,) -> (C*V,), c-major

    # gcn conv + graph contraction: M[(ci,v),(c,w)] = sum_k Wg[k*C+c,ci] A[k,v,w]
    Wg = p['Wg'].reshape(K, C_out, C_in)
    M_gcn = jnp.einsum('kcm,kvw->mvcw', Wg, A).reshape(C_in * V, C_out * V)
    bz = jnp.einsum('kc,kvw->cw', p['bg'].reshape(K, C_out), A).reshape(-1)

    s1, b1 = rep(p['bn1_s']), rep(p['bn1_b'])
    M1 = M_gcn * s1[None, :]
    shift1 = bz * s1 + b1

    # Residual 1x1 conv + BN folded: kron(Wr^T, I_V) * scale.
    sr, brb = rep(p['bnr_s']), rep(p['bnr_b'])
    Mr = jnp.kron(p['Wr'].T, eyeV) * sr[None, :]
    shift_r = rep(p['br']) * sr + brb

    Mcomb = jnp.concatenate([M1, Mr], axis=1)           # (C_in*V, 2*C_out*V)
    shift_comb = jnp.concatenate([shift1, shift_r])[None, :]

    # Temporal taps: kron-expanded, BN2 scale folded, stacked along K so the
    # kernel does one (R, Kt*CV) @ (Kt*CV, CV) matmul.
    # NOTE: the kron form is block-diagonal in v and scales as Kt*(C_out*V)^2;
    # at realistic C_out >= 128 switch to rows=(n,t,v)/lanes=c_out with the raw
    # (Kt, C_out, C_out) taps (and bf16 MXU operands) to stay inside v7x VMEM.
    s2, b2 = rep(p['bn2_s']), rep(p['bn2_b'])
    Wt_cat = jnp.concatenate(
        [jnp.kron(p['Wt'][dt].T, eyeV) * s2[None, :] for dt in range(Kt)],
        axis=0)                                         # (Kt*C_out*V, C_out*V)
    shift2 = (rep(p['bt']) * s2 + b2)[None, :]
    return Mcomb, shift_comb, Wt_cat, shift2


@jax.jit
def st_gcn_forward(x, A, p):
    """x: (N, C_in, T, V) NCHW like PyTorch; A: (K, V, V). Returns (out, A)."""
    N, C_in, T, V = x.shape
    C_out = p['Wr'].shape[0]
    K = A.shape[0]
    Kt = p['Wt'].shape[0]
    CV_in, CV_out = C_in * V, C_out * V

    Mcomb, shift_comb, Wt_cat, shift2 = _fold_params(
        A.astype(jnp.float32), p, C_in, C_out, V, K, Kt)

    # rows = (n, t), lanes = (c, v): lane-dense (., 128) working/output layout.
    # (For stacked ST-GCN blocks, keep this row layout between layers; the
    # transposes here only exist to match the PyTorch NCHW interface.)
    x_rows = jnp.transpose(x, (0, 2, 1, 3)).reshape(N * T, CV_in)
    x_rows = x_rows.astype(jnp.float32)

    # Row tiling: whole T-length samples per block, ~512 rows target.  At the
    # toy size this collapses to a single grid step (G=1) -- the old G=2 split
    # was a net loss on single-TC v5e/v6e and duplicated weight DMA on v7x.
    ROW_TILE_TARGET = 512
    samples_per_block = max(1, min(N, ROW_TILE_TARGET // max(T, 1)))
    while N % samples_per_block:
        samples_per_block -= 1
    G = N // samples_per_block
    R = samples_per_block * T
    assert R % T == 0  # roll+mask temporal boundary handling requires this

    kernel = functools.partial(st_gcn_kernel, T=T, Kt=Kt)

    out_rows = pl.pallas_call(
        kernel,
        out_shape=jax.ShapeDtypeStruct((N * T, CV_out), jnp.float32),
        grid_spec=pltpu.PrefetchScalarGridSpec(
            num_scalar_prefetch=0,
            grid=(G,),
            in_specs=[
                pl.BlockSpec((R, CV_in), lambda i: (i, 0)),
                # Constant-index operands below; with G=1 there is only one
                # grid step so they are fetched exactly once.
                pl.BlockSpec(Mcomb.shape, lambda i: (0, 0)),
                pl.BlockSpec(shift_comb.shape, lambda i: (0, 0)),
                pl.BlockSpec(Wt_cat.shape, lambda i: (0, 0)),
                pl.BlockSpec(shift2.shape, lambda i: (0, 0)),
            ],
            out_specs=pl.BlockSpec((R, CV_out), lambda i: (i, 0)),
        ),
        compiler_params=pltpu.CompilerParams(
            dimension_semantics=("parallel",)),
    )(x_rows, Mcomb, shift_comb, Wt_cat, shift2)

    out = out_rows.reshape(N, T, C_out, V).transpose(0, 2, 1, 3)
    return out, A


def reference(x, A, p):
    """Pure-JAX reference mirroring the PyTorch forward (eval-mode BN)."""
    KC = p['Wg'].shape[0]
    C_out = p['Wr'].shape[0]
    K = KC // C_out
    Kt = p['Wt'].shape[0]
    pad = (Kt - 1) // 2
    N, C_in, T, V = x.shape

    def ch(v):  # (C,1) -> broadcastable over NCHW
        return v[:, 0][None, :, None, None]

    y = jnp.einsum('oc,nctv->notv', p['Wg'], x) + ch(p['bg'])
    y = y.reshape(N, K, C_out, T, V)
    z = jnp.einsum('nkctv,kvw->nctw', y, A)
    z = z * ch(p['bn1_s']) + ch(p['bn1_b'])
    z = jnp.maximum(z, 0.0)
    zp = jnp.pad(z, ((0, 0), (0, 0), (pad, pad), (0, 0)))
    t = sum(jnp.einsum('oc,nctv->notv', p['Wt'][dt], zp[:, :, dt:dt + T, :])
            for dt in range(Kt))
    t = t + ch(p['bt'])
    t = t * ch(p['bn2_s']) + ch(p['bn2_b'])
    r = jnp.einsum('oc,nctv->notv', p['Wr'], x) + ch(p['br'])
    r = r * ch(p['bnr_s']) + ch(p['bnr_b'])
    return jnp.maximum(t + r, 0.0)


def make_params(key, C_in, C_out, K, Kt):
    ks = jax.random.split(key, 20)
    eps = 1e-5

    def bn_fold(kg, kb, km, kv, C):
        gamma = 1.0 + 0.1 * jax.random.normal(ks[kg], (C,), jnp.float32)
        beta = 0.1 * jax.random.normal(ks[kb], (C,), jnp.float32)
        mean = 0.1 * jax.random.normal(ks[km], (C,), jnp.float32)
        var = 1.0 + 0.1 * jax.random.uniform(ks[kv], (C,), jnp.float32)
        s = gamma / jnp.sqrt(var + eps)
        return s.reshape(C, 1), (beta - mean * s).reshape(C, 1)

    p = {}
    p['Wg'] = 0.2 * jax.random.normal(ks[0], (K * C_out, C_in), jnp.float32)
    p['bg'] = 0.1 * jax.random.normal(ks[1], (K * C_out, 1), jnp.float32)
    p['Wt'] = 0.2 * jax.random.normal(ks[2], (Kt, C_out, C_out), jnp.float32)
    p['bt'] = 0.1 * jax.random.normal(ks[3], (C_out, 1), jnp.float32)
    p['Wr'] = 0.2 * jax.random.normal(ks[4], (C_out, C_in), jnp.float32)
    p['br'] = 0.1 * jax.random.normal(ks[5], (C_out, 1), jnp.float32)
    p['bn1_s'], p['bn1_b'] = bn_fold(6, 7, 8, 9, C_out)
    p['bn2_s'], p['bn2_b'] = bn_fold(10, 11, 12, 13, C_out)
    p['bnr_s'], p['bnr_b'] = bn_fold(14, 15, 16, 17, C_out)
    return p


if __name__ == "__main__":
    # Config: st_gcn(in_channels=4, out_channels=8, kernel_size=(3, 3),
    #                stride=1, dropout=0, residual=True)
    N, C_in, C_out, T, V = 2, 4, 8, 8, 16
    Kt, K = 3, 3

    key = jax.random.PRNGKey(0)
    kx, kA, kp = jax.random.split(key, 3)
    x = jax.random.normal(kx, (N, C_in, T, V), jnp.float32)
    A = jax.random.uniform(kA, (K, V, V), jnp.float32)
    params = make_params(kp, C_in, C_out, K, Kt)

    out, A_out = st_gcn_forward(x, A, params)
    out = jax.block_until_ready(out)

    ref = reference(x, A, params)
    assert out.shape == (N, C_out, T, V)
    assert jnp.allclose(out, ref, atol=2e-4, rtol=2e-4), (
        float(jnp.max(jnp.abs(out - ref))))
    print("KERNEL_OK")
</pallas_src>

<mosaic_0001>
module attributes {stable_mosaic.version = 11 : i64} {
  func.func @st_gcn_kernel(%arg0: i32, %arg1: memref<16x64xf32, #tpu.memory_space<vmem>>, %arg2: memref<64x256xf32, #tpu.memory_space<vmem>>, %arg3: memref<1x256xf32, #tpu.memory_space<vmem>>, %arg4: memref<384x128xf32, #tpu.memory_space<vmem>>, %arg5: memref<1x128xf32, #tpu.memory_space<vmem>>, %arg6: memref<16x128xf32, #tpu.memory_space<vmem>>) attributes {dimension_semantics = [#tpu.dimension_semantics<parallel>], iteration_bounds = array<i64: 1>, scalar_prefetch = 0 : i64, scratch_operands = 0 : i64, tpu.core_type = #tpu.core_type<tc>, window_params = [{transform_indices = @transform_0, window_bounds = array<i64: 16, 64>}, {pipeline_mode = #tpu.pipeline_mode<synchronous>, transform_indices = @transform_1, window_bounds = array<i64: 64, 256>}, {pipeline_mode = #tpu.pipeline_mode<synchronous>, transform_indices = @transform_2, window_bounds = array<i64: 1, 256>}, {pipeline_mode = #tpu.pipeline_mode<synchronous>, transform_indices = @transform_3, window_bounds = array<i64: 384, 128>}, {pipeline_mode = #tpu.pipeline_mode<synchronous>, transform_indices = @transform_4, window_bounds = array<i64: 1, 128>}, {transform_indices = @transform_5, window_bounds = array<i64: 16, 128>}]} {
    %c0 = arith.constant 0 : index
    %c0_0 = arith.constant 0 : index
    %0 = vector.load %arg1[%c0, %c0_0] : memref<16x64xf32, #tpu.memory_space<vmem>>, vector<16x64xf32>
    %c0_1 = arith.constant 0 : index
    %c0_2 = arith.constant 0 : index
    %1 = vector.load %arg2[%c0_1, %c0_2] : memref<64x256xf32, #tpu.memory_space<vmem>>, vector<64x256xf32>
    %cst = arith.constant dense<0.000000e+00> : vector<16x256xf32>
    %2 = tpu.matmul %0, %1, %cst {dimension_numbers = #tpu.dot_dimension_numbers<[1], [0], [0], [1], [0, 0, 1, 1], [], []>} : vector<16x64xf32>, vector<64x256xf32>, vector<16x256xf32> -> vector<16x256xf32>
    %c0_3 = arith.constant 0 : index
    %c0_4 = arith.constant 0 : index
    %3 = vector.load %arg3[%c0_3, %c0_4] : memref<1x256xf32, #tpu.memory_space<vmem>>, vector<1x256xf32>
    %4 = vector.broadcast %3 : vector<1x256xf32> to vector<16x256xf32>
    %5 = arith.addf %2, %4 : vector<16x256xf32>
    %6 = vector.extract_strided_slice %5 {offsets = [0, 0], sizes = [16, 128], strides = [1, 1]} : vector<16x256xf32> to vector<16x128xf32>
    %cst_5 = arith.constant 0.000000e+00 : f32
    %7 = vector.broadcast %cst_5 : f32 to vector<16x128xf32>
    %8 = arith.maximumf %6, %7 : vector<16x128xf32>
    %9 = vector.extract_strided_slice %5 {offsets = [0, 128], sizes = [16, 128], strides = [1, 1]} : vector<16x256xf32> to vector<16x128xf32>
    %10 = tpu.iota {dimensions = array<i32: 0>} : vector<16x1xi32>
    %c8_i32 = arith.constant 8 : i32
    %c0_i32 = arith.constant 0 : i32
    %11 = arith.cmpi eq, %c8_i32, %c0_i32 : i32
    %c1_i32 = arith.constant 1 : i32
    %12 = arith.select %11, %c1_i32, %c8_i32 : i32
    %13 = vector.broadcast %12 : i32 to vector<16x1xi32>
    %14 = arith.remsi %10, %13 : vector<16x1xi32>
    %c0_i32_6 = arith.constant 0 : i32
    %15 = vector.broadcast %c0_i32_6 : i32 to vector<16x1xi32>
    %16 = arith.cmpi ne, %14, %15 : vector<16x1xi32>
    %c0_i32_7 = arith.constant 0 : i32
    %17 = vector.broadcast %c0_i32_7 : i32 to vector<16x1xi32>
    %18 = arith.cmpi slt, %14, %17 : vector<16x1xi32>
    %c0_i32_8 = arith.constant 0 : i32
    %19 = arith.cmpi slt, %12, %c0_i32_8 : i32
    %20 = vector.broadcast %19 : i1 to vector<16x1xi1>
    %21 = vector.broadcast %20 : vector<16x1xi1> to vector<16x1xi1>
    %22 = arith.xori %18, %21 : vector<16x1xi1>
    %23 = arith.andi %22, %16 : vector<16x1xi1>
    %24 = vector.broadcast %12 : i32 to vector<16x1xi32>
    %25 = arith.addi %14, %24 : vector<16x1xi32>
    %26 = arith.select %23, %25, %14 : vector<16x1xi1>, vector<16x1xi32>
    %c1_i32_9 = arith.constant 1 : i32
    %27 = tpu.dynamic_rotate %8 by %c1_i32_9 dim 0 : vector<16x128xf32>, i32 -> vector<16x128xf32>
    %c-1_i32 = arith.constant -1 : i32
    %28 = vector.broadcast %c-1_i32 : i32 to vector<16x1xi32>
    %29 = arith.addi %26, %28 : vector<16x1xi32>
    %c0_i32_10 = arith.constant 0 : i32
    %30 = vector.broadcast %c0_i32_10 : i32 to vector<16x1xi32>
    %31 = arith.cmpi sge, %29, %30 : vector<16x1xi32>
    %c-1_i32_11 = arith.constant -1 : i32
    %32 = vector.broadcast %c-1_i32_11 : i32 to vector<16x1xi32>
    %33 = arith.addi %26, %32 : vector<16x1xi32>
    %c8_i32_12 = arith.constant 8 : i32
    %34 = vector.broadcast %c8_i32_12 : i32 to vector<16x1xi32>
    %35 = arith.cmpi slt, %33, %34 : vector<16x1xi32>
    %36 = arith.andi %31, %35 : vector<16x1xi1>
    %37 = arith.extui %36 : vector<16x1xi1> to vector<16x1xi32>
    %38 = arith.sitofp %37 : vector<16x1xi32> to vector<16x1xf32>
    %39 = vector.broadcast %38 : vector<16x1xf32> to vector<16x128xf32>
    %40 = arith.mulf %27, %39 : vector<16x128xf32>
    %c15_i32 = arith.constant 15 : i32
    %41 = tpu.dynamic_rotate %8 by %c15_i32 dim 0 : vector<16x128xf32>, i32 -> vector<16x128xf32>
    %c1_i32_13 = arith.constant 1 : i32
    %42 = vector.broadcast %c1_i32_13 : i32 to vector<16x1xi32>
    %43 = arith.addi %26, %42 : vector<16x1xi32>
    %c0_i32_14 = arith.constant 0 : i32
    %44 = vector.broadcast %c0_i32_14 : i32 to vector<16x1xi32>
    %45 = arith.cmpi sge, %43, %44 : vector<16x1xi32>
    %c1_i32_15 = arith.constant 1 : i32
    %46 = vector.broadcast %c1_i32_15 : i32 to vector<16x1xi32>
    %47 = arith.addi %26, %46 : vector<16x1xi32>
    %c8_i32_16 = arith.constant 8 : i32
    %48 = vector.broadcast %c8_i32_16 : i32 to vector<16x1xi32>
    %49 = arith.cmpi slt, %47, %48 : vector<16x1xi32>
    %50 = arith.andi %45, %49 : vector<16x1xi1>
    %51 = arith.extui %50 : vector<16x1xi1> to vector<16x1xi32>
    %52 = arith.sitofp %51 : vector<16x1xi32> to vector<16x1xf32>
    %53 = vector.broadcast %52 : vector<16x1xf32> to vector<16x128xf32>
    %54 = arith.mulf %41, %53 : vector<16x128xf32>
    %55 = tpu.concatenate %40, %8, %54 in 1 : vector<16x128xf32>, vector<16x128xf32>, vector<16x128xf32> -> vector<16x384xf32>
    %c0_17 = arith.constant 0 : index
    %c0_18 = arith.constant 0 : index
    %56 = vector.load %arg4[%c0_17, %c0_18] : memref<384x128xf32, #tpu.memory_space<vmem>>, vector<384x128xf32>
    %cst_19 = arith.constant dense<0.000000e+00> : vector<16x128xf32>
    %57 = tpu.matmul %55, %56, %cst_19 {dimension_numbers = #tpu.dot_dimension_numbers<[1], [0], [0], [1], [0, 0, 1, 1], [], []>} : vector<16x384xf32>, vector<384x128xf32>, vector<16x128xf32> -> vector<16x128xf32>
    %c0_20 = arith.constant 0 : index
    %c0_21 = arith.constant 0 : index
    %58 = vector.load %arg5[%c0_20, %c0_21] : memref<1x128xf32, #tpu.memory_space<vmem>>, vector<1x128xf32>
    %59 = vector.broadcast %58 : vector<1x128xf32> to vector<16x128xf32>
    %60 = arith.addf %57, %59 : vector<16x128xf32>
    %61 = arith.addf %60, %9 : vector<16x128xf32>
    %cst_22 = arith.constant 0.000000e+00 : f32
    %62 = vector.broadcast %cst_22 : f32 to vector<16x128xf32>
    %63 = arith.maximumf %61, %62 : vector<16x128xf32>
    %c0_23 = arith.constant 0 : index
    %c0_24 = arith.constant 0 : index
    %64 = vector.load %arg6[%c0_23, %c0_24] : memref<16x128xf32, #tpu.memory_space<vmem>>, vector<16x128xf32>
    tpu.vector_store %arg6[%c0_23, %c0_24], %63 {strides = array<i32>} : memref<16x128xf32, #tpu.memory_space<vmem>>, vector<16x128xf32>,
    return
  }
  func.func @transform_0(%arg0: i32) -> (i32, i32) {
    %c0_i32 = arith.constant 0 : i32
    %c0_i32_0 = arith.constant 0 : i32
    return %arg0, %c0_i32 : i32, i32
  }
  func.func @transform_1(%arg0: i32) -> (i32, i32) {
    %c0_i32 = arith.constant 0 : i32
    %c0_i32_0 = arith.constant 0 : i32
    %c0_i32_1 = arith.constant 0 : i32
    return %c0_i32, %c0_i32_0 : i32, i32
  }
  func.func @transform_2(%arg0: i32) -> (i32, i32) {
    %c0_i32 = arith.constant 0 : i32
    %c0_i32_0 = arith.constant 0 : i32
    %c0_i32_1 = arith.constant 0 : i32
    return %c0_i32, %c0_i32_0 : i32, i32
  }
  func.func @transform_3(%arg0: i32) -> (i32, i32) {
    %c0_i32 = arith.constant 0 : i32
    %c0_i32_0 = arith.constant 0 : i32
    %c0_i32_1 = arith.constant 0 : i32
    return %c0_i32, %c0_i32_0 : i32, i32
  }
  func.func @transform_4(%arg0: i32) -> (i32, i32) {
    %c0_i32 = arith.constant 0 : i32
    %c0_i32_0 = arith.constant 0 : i32
    %c0_i32_1 = arith.constant 0 : i32
    return %c0_i32, %c0_i32_0 : i32, i32
  }
  func.func @transform_5(%arg0: i32) -> (i32, i32) {
    %c0_i32 = arith.constant 0 : i32
    %c0_i32_0 = arith.constant 0 : i32
    return %arg0, %c0_i32 : i32, i32
  }
}

</mosaic_0001>

<llo_original>
// kernel: mul.62
$region0: #{mul.62}
  %s0 = inlined_call_operand.vmem [shape: f32[8,16], index: 0, kind: input, shape index: {}]
  %s1 = inlined_call_operand.vmem [shape: f32[128], index: 1, kind: output, shape index: {}]
  $region1: #{mul.62} parent=0
    #allocation0 [shape = 'u8[4096]{0}', space=vmem, size = 0x1000, scoped, tag = 'scoped mem for output reshape']
    %v2 = vld [vmem:[%s0] sm:$0x1]
    %vm3 = vcmask 130048
    %4 = vst.msk [vmem:[#allocation0] sm:$0x1] %vm3, %v2
    %s5 = scalar_lea.vmem %s0, 7
    %v6 = vld [vmem:[%s5] sm:$0x1]
    %7 = vrot.lane.b32.xlu0 %v6, 112
    %v8 = vpop.permute.xlu0 %7
    %vm9 = vcmask 1048448
    %10 = vst.msk [vmem:[#allocation0] sm:$0x1] %vm9, %v8
    %s11 = scalar_lea.vmem %s0, 6
    %v12 = vld [vmem:[%s11] sm:$0x1]
    %13 = vrot.lane.b32.xlu0 %v12, 96
    %v14 = vpop.permute.xlu0 %13
    %vm15 = vcmask 917248
    %16 = vst.msk [vmem:[#allocation0] sm:$0x1] %vm15, %v14
    %s17 = scalar_lea.vmem %s0, 5
    %v18 = vld [vmem:[%s17] sm:$0x1]
    %19 = vrot.lane.b32.xlu0 %v18, 80
    %v20 = vpop.permute.xlu0 %19
    %vm21 = vcmask 786048
    %22 = vst.msk [vmem:[#allocation0] sm:$0x1] %vm21, %v20
    %s23 = scalar_lea.vmem %s0, 4
    %v24 = vld [vmem:[%s23] sm:$0x1]
    %25 = vrot.lane.b32.xlu0 %v24, 64
    %v26 = vpop.permute.xlu0 %25
    %vm27 = vcmask 654848
    %28 = vst.msk [vmem:[#allocation0] sm:$0x1] %vm27, %v26
    %s29 = scalar_lea.vmem %s0, 3
    %v30 = vld [vmem:[%s29] sm:$0x1]
    %31 = vrot.lane.b32.xlu0 %v30, 48
    %v32 = vpop.permute.xlu0 %31
    %vm33 = vcmask 523648
    %34 = vst.msk [vmem:[#allocation0] sm:$0x1] %vm33, %v32
    %s35 = scalar_lea.vmem %s0, 2
    %v36 = vld [vmem:[%s35] sm:$0x1]
    %37 = vrot.lane.b32.xlu0 %v36, 32
    %v38 = vpop.permute.xlu0 %37
    %vm39 = vcmask 392448
    %40 = vst.msk [vmem:[#allocation0] sm:$0x1] %vm39, %v38
    %s41 = scalar_lea.vmem %s0, 1
    %v42 = vld [vmem:[%s41] sm:$0x1]
    %43 = vrot.lane.b32.xlu0 %v42, 16
    %v44 = vpop.permute.xlu0 %43
    %vm45 = vcmask 261248
    %46 = vst.msk [vmem:[#allocation0] sm:$0x1] %vm45, %v44
    %s48 = sshllo.u32 0, 1
    %v50 = vld [vmem:[#allocation0] sm:%s48]
    %s51 = sshllo.u32 0, 1
    %52 = vst [vmem:[%s1] sm:%s51] %v50

// kernel: st_gcn_forward.1
$region0: #{st_gcn_forward.1}
  #allocation0 [shape = 'u32[]', space=smem, size = 0x4, offset = 0x4, fixed_abs, tag = 'smem constant byte address 0x4 - core index']
  #allocation1 [shape = 'u32[144,128]{1,0:T(1,128)}', space=vmem, size = 0x12000, scoped, tag = 'internal scratch']
  %s0 = inlined_call_operand.vmem [shape: f32[16,64], index: 0, kind: input, shape index: {}]
  %s1 = inlined_call_operand.vmem [shape: f32[64,256], index: 1, kind: input, shape index: {}]
  %s2 = inlined_call_operand.vmem [shape: f32[1,256], index: 2, kind: input, shape index: {}]
  %s3 = inlined_call_operand.vmem [shape: f32[384,128], index: 3, kind: input, shape index: {}]
  %s4 = inlined_call_operand.vmem [shape: f32[1,128], index: 4, kind: input, shape index: {}]
  %s5 = inlined_call_operand.vmem [shape: f32[16,128], index: 5, kind: output, shape index: {}]
  %s6 = sld [smem:[#allocation0]]
  $region30: #{st_gcn_forward.1} parent=0
    _
  %s8 = ssub.s32 1, %s6
  %s9 = scalar_select 0, %s8, %s6
  // Predicated region
  $region2: #{st_gcn_forward.1} parent=0 // pred_check
    _
  $region3: #{st_gcn_forward.1} parent=0 // pred_check_branch
    %11 = sbr.rel (0) target = $region5
  $region4: #{st_gcn_forward.1} parent=0 // pred_region
    _
  $region5: #{st_gcn_forward.1} parent=0 // pred_fallthru
    _
  // Predicated region
  $region6: #{st_gcn_forward.1} parent=0 // pred_check
    _
  $region7: #{st_gcn_forward.1} parent=0 // pred_check_branch
    %13 = sbr.rel (0) target = $region9
  $region8: #{st_gcn_forward.1} parent=0 // pred_region
    _
  $region9: #{st_gcn_forward.1} parent=0 // pred_fallthru
    _
  // Predicated region
  $region10: #{st_gcn_forward.1} parent=0 // pred_check
    _
  $region11: #{st_gcn_forward.1} parent=0 // pred_check_branch
    %15 = sbr.rel (0) target = $region13
  $region12: #{st_gcn_forward.1} parent=0 // pred_region
    _
  $region13: #{st_gcn_forward.1} parent=0 // pred_fallthru
    _
  // Predicated region
  $region14: #{st_gcn_forward.1} parent=0 // pred_check
    _
  $region15: #{st_gcn_forward.1} parent=0 // pred_check_branch
    %17 = sbr.rel (0) target = $region17
  $region16: #{st_gcn_forward.1} parent=0 // pred_region
    _
  $region17: #{st_gcn_forward.1} parent=0 // pred_fallthru
    _
  // Predicated region
  $region18: #{st_gcn_forward.1} parent=0 // pred_check
    _
  $region19: #{st_gcn_forward.1} parent=0 // pred_check_branch
    %19 = sbr.rel (0) target = $region21
  $region20: #{st_gcn_forward.1} parent=0 // pred_region
    _
  $region21: #{st_gcn_forward.1} parent=0 // pred_fallthru
    _
  %v20 = vld [vmem:[%s0] sm:$0xff]
  %v21 = vld [vmem:[%s0 + $0x8] sm:$0xff]
  %v22 = vld [vmem:[%s1] sm:$0xff]
  %v23 = vld [vmem:[%s1 + $0x8] sm:$0xff]
  %v24 = vld [vmem:[%s1 + $0x10] sm:$0xff]
  %v25 = vld [vmem:[%s1 + $0x18] sm:$0xff]
  %v26 = vld [vmem:[%s1 + $0x20] sm:$0xff]
  %v27 = vld [vmem:[%s1 + $0x28] sm:$0xff]
  %v28 = vld [vmem:[%s1 + $0x30] sm:$0xff]
  %v29 = vld [vmem:[%s1 + $0x38] sm:$0xff]
  %v30 = vld [vmem:[%s1 + $0x40] sm:$0xff]
  %v31 = vld [vmem:[%s1 + $0x48] sm:$0xff]
  %v32 = vld [vmem:[%s1 + $0x50] sm:$0xff]
  %v33 = vld [vmem:[%s1 + $0x58] sm:$0xff]
  %v34 = vld [vmem:[%s1 + $0x60] sm:$0xff]
  %v35 = vld [vmem:[%s1 + $0x68] sm:$0xff]
  %v36 = vld [vmem:[%s1 + $0x70] sm:$0xff]
  %v37 = vld [vmem:[%s1 + $0x78] sm:$0xff]
  %v38 = vld [vmem:[%s2] sm:$0x3]
  %v40 = vlaneseq
  %v41 = vshrl.u32 %v40, 7
  %v42 = vsub.s32 0, %v41
  %v43 = vrot.slane %v38, %v42
  %v44 = vlaneseq
  %v45 = vshrl.u32 %v44, 7
  %v46 = vsub.s32 1, %v45
  %v47 = vrot.slane %v38, %v46
  %vm50 = vcmask 523264
  %v52 = vsel %vm50, %v20, 0
  %v55 = vsel %vm50, %v21, 0
  %57 = vmatprep.subr.mxu0 %v23
  %58 = vmatpush1.msra.mxu0 %v22
  %59 = vmatprep.subr.mxu0 %v25
  %60 = vmatpush1.msra.mxu0 %v24
  %61 = vmatprep.subr.mxu0 %v27
  %62 = vmatpush1.msra.mxu0 %v26
  %63 = vmatprep.subr.mxu0 %v29
  %64 = vmatpush1.msra.mxu0 %v28
  %65 = vmatprep.subr.mxu0 %v31
  %66 = vmatpush1.msra.mxu0 %v30
  %67 = vmatprep.subr.mxu0 %v33
  %68 = vmatpush1.msra.mxu0 %v32
  %69 = vmatprep.subr.mxu0 %v35
  %70 = vmatpush1.msra.mxu0 %v34
  %71 = vmatprep.subr.mxu0 %v37
  %72 = vmatpush1.msra.mxu0 %v36
  %73 = vmatprep.subr.mxu0 0.0
  %74 = vmatpush1.msra.mxu0 0.0
  %75 = vmatprep.subr.mxu0 0.0
  %76 = vmatpush1.msra.mxu0 0.0
  %77 = vmatprep.subr.mxu0 0.0
  %78 = vmatpush1.msra.mxu0 0.0
  %79 = vmatprep.subr.mxu0 0.0
  %80 = vmatpush1.msra.mxu0 0.0
  %81 = vmatprep.subr.mxu0 0.0
  %82 = vmatpush1.msra.mxu0 0.0
  %83 = vmatprep.subr.mxu0 0.0
  %84 = vmatpush1.msra.mxu0 0.0
  %85 = vmatprep.subr.mxu0 0.0
  %86 = vmatpush1.msra.mxu0 0.0
  %87 = vmatprep.subr.mxu0 0.0
  %88 = vmatpush1.msra.mxu0 0.0
  %89 = vmatprep.subr.mxu0 0.0
  %90 = vmatpush1.msra.mxu0 0.0
  %91 = vmatprep.subr.mxu0 0.0
  %92 = vmatpush1.msra.mxu0 0.0
  %93 = vmatprep.subr.mxu0 0.0
  %94 = vmatpush1.msra.mxu0 0.0
  %95 = vmatprep.subr.mxu0 0.0
  %96 = vmatpush1.msra.mxu0 0.0
  %97 = vmatprep.subr.mxu0 0.0
  %98 = vmatpush1.msra.mxu0 0.0
  %99 = vmatprep.subr.mxu0 0.0
  %100 = vmatpush1.msra.mxu0 0.0
  %101 = vmatprep.subr.mxu0 0.0
  %102 = vmatpush1.msra.mxu0 0.0
  %103 = vmatprep.subr.mxu0 0.0
  %104 = vmatpush1.msra.mxu0 0.0
  %105 = vmatprep.subr.mxu0 0.0
  %106 = vmatpush1.msra.mxu0 0.0
  %107 = vmatprep.subr.mxu0 0.0
  %108 = vmatpush1.msra.mxu0 0.0
  %109 = vmatprep.subr.mxu0 0.0
  %110 = vmatpush1.msra.mxu0 0.0
  %111 = vmatprep.subr.mxu0 0.0
  %112 = vmatpush1.msra.mxu0 0.0
  %113 = vmatprep.subr.mxu0 0.0
  %114 = vmatpush1.msra.mxu0 0.0
  %115 = vmatprep.subr.mxu0 0.0
  %116 = vmatpush1.msra.mxu0 0.0
  %117 = vmatprep.subr.mxu0 0.0
  %118 = vmatpush1.msra.mxu0 0.0
  %119 = vmatprep.subr.mxu0 0.0
  %120 = vmatpush1.msra.mxu0 0.0
  %121 = vmatprep.mubr.f32.mxu0 0.0
  %122 = vmatmul.mubr.f32.gmra.mrb[0].mxu0 %v52
  %v123 = vpop.f32.mrb[0].mxu0
  %v124 = vadd.f32 %v43, %v123
  %v125 = vpop.f32.mrb[0].mxu0
  %v126 = vadd.f32 %v47, %v125
  %127 = vmatprep.mubr.f32.mxu0 0.0
  %128 = vmatmul.mubr.f32.gmra.mrb[0].mxu0 %v55
  %v129 = vpop.f32.mrb[0].mxu0
  %v130 = vadd.f32 %v43, %v129
  %v131 = vpop.f32.mrb[0].mxu0
  %v132 = vadd.f32 %v47, %v131
  %133 = vdwg.mxu0
  %v134 = vmax.f32 %v124, 0.0
  %v135 = vmax.f32 %v130, 0.0
  %v136 = vlaneseq
  %v137 = vshrl.u32 %v136, 7
  %v138 = vadd.s32 %v137, 8
  %vm139 = vcmp.lt.s32.totalorder %v137, 0
  %v140 = vsub.s32 0, %v137
  %v141 = vsel %vm139, %v140, %v137
  %v142 = vshrl.u32 %v141, 3
  %v143 = vand.u32 %v141, 7
  %v144 = vsub.s32 0, %v143
  %v145 = vsel %vm139, %v144, %v143
  %vm146 = vcmp.lt.s32.totalorder %v138, 0
  %v147 = vsub.s32 0, %v138
  %v148 = vsel %vm146, %v147, %v138
  %v149 = vshrl.u32 %v148, 3
  %v150 = vand.u32 %v148, 7
  %v151 = vsub.s32 0, %v150
  %v152 = vsel %vm146, %v151, %v150
  %vm153 = vcmp.ne.s32.totalorder %v145, 0
  %vm154 = vcmp.ne.s32.totalorder %v152, 0
  %vm155 = vcmp.lt.s32.totalorder %v145, 0
  %vm156 = vcmp.lt.s32.totalorder %v152, 0
  %vm157 = vmand %vm155, %vm153
  %vm158 = vmand %vm156, %vm154
  %v159 = vadd.s32 %v145, 8
  %v160 = vadd.s32 %v152, 8
  %v161 = vsel %vm157, %v159, %v145
  %v162 = vsel %vm158, %v160, %v152
  %v163 = vrot.slane %v134, 7
  %v164 = vrot.slane %v135, 7
  %vm165 = vcmp.lt.s32.totalorder %v137, 1
  %v166 = vsel %vm165, %v163, %v164
  %v167 = vsel %vm165, %v164, %v163
  %v168 = vadd.s32 %v161, 4294967295
  %v169 = vadd.s32 %v162, 4294967295
  %vm170 = vcmp.ge.s32.totalorder %v168, 0
  %vm171 = vcmp.ge.s32.totalorder %v169, 0
  %vm172 = vcmp.lt.s32.totalorder %v168, 8
  %vm173 = vcmp.lt.s32.totalorder %v169, 8
  %vm174 = vmand %vm170, %vm172
  %vm175 = vmand %vm171, %vm173
  %v176 = vsel %vm174, 1, 0
  %v177 = vsel %vm175, 1, 0
  %v178 = vcvt.s32.f32 %v176
  %v179 = vcvt.s32.f32 %v177
  %v180 = vmul.f32 %v167, %v178
  %v181 = vmul.f32 %v166, %v179
  %v182 = vrot.slane %v134, 1
  %v183 = vrot.slane %v135, 1
  %vm184 = vcmp.lt.s32.totalorder %v137, 7
  %v185 = vsel %vm184, %v182, %v183
  %v186 = vsel %vm184, %v183, %v182
  %v187 = vadd.s32 %v161, 1
  %v188 = vadd.s32 %v162, 1
  %vm189 = vcmp.ge.s32.totalorder %v187, 0
  %vm190 = vcmp.ge.s32.totalorder %v188, 0
  %vm191 = vcmp.lt.s32.totalorder %v187, 8
  %vm192 = vcmp.lt.s32.totalorder %v188, 8
  %vm193 = vmand %vm189, %vm191
  %vm194 = vmand %vm190, %vm192
  %v195 = vsel %vm193, 1, 0
  %v196 = vsel %vm194, 1, 0
  %v197 = vcvt.s32.f32 %v195
  %v198 = vcvt.s32.f32 %v196
  %v199 = vmul.f32 %v185, %v197
  %v200 = vmul.f32 %v186, %v198
  %v201 = vld [vmem:[%s3] sm:$0xff]
  %v202 = vld [vmem:[%s3 + $0x8] sm:$0xff]
  %v203 = vld [vmem:[%s3 + $0x10] sm:$0xff]
  %v204 = vld [vmem:[%s3 + $0x18] sm:$0xff]
  %v205 = vld [vmem:[%s3 + $0x20] sm:$0xff]
  %v206 = vld [vmem:[%s3 + $0x28] sm:$0xff]
  %v207 = vld [vmem:[%s3 + $0x30] sm:$0xff]
  %v208 = vld [vmem:[%s3 + $0x38] sm:$0xff]
  %v209 = vld [vmem:[%s3 + $0x40] sm:$0xff]
  %v210 = vld [vmem:[%s3 + $0x48] sm:$0xff]
  %v211 = vld [vmem:[%s3 + $0x50] sm:$0xff]
  %v212 = vld [vmem:[%s3 + $0x58] sm:$0xff]
  %v213 = vld [vmem:[%s3 + $0x60] sm:$0xff]
  %v214 = vld [vmem:[%s3 + $0x68] sm:$0xff]
  %v215 = vld [vmem:[%s3 + $0x70] sm:$0xff]
  %v216 = vld [vmem:[%s3 + $0x78] sm:$0xff]
  %v217 = vld [vmem:[%s3 + $0x80] sm:$0xff]
  %v218 = vld [vmem:[%s3 + $0x88] sm:$0xff]
  %v219 = vld [vmem:[%s3 + $0x90] sm:$0xff]
  %v220 = vld [vmem:[%s3 + $0x98] sm:$0xff]
  %v221 = vld [vmem:[%s3 + $0xa0] sm:$0xff]
  %v222 = vld [vmem:[%s3 + $0xa8] sm:$0xff]
  %v223 = vld [vmem:[%s3 + $0xb0] sm:$0xff]
  %v224 = vld [vmem:[%s3 + $0xb8] sm:$0xff]
  %v225 = vld [vmem:[%s3 + $0xc0] sm:$0xff]
  %v226 = vld [vmem:[%s3 + $0xc8] sm:$0xff]
  %v227 = vld [vmem:[%s3 + $0xd0] sm:$0xff]
  %v228 = vld [vmem:[%s3 + $0xd8] sm:$0xff]
  %v229 = vld [vmem:[%s3 + $0xe0] sm:$0xff]
  %v230 = vld [vmem:[%s3 + $0xe8] sm:$0xff]
  %v231 = vld [vmem:[%s3 + $0xf0] sm:$0xff]
  %v232 = vld [vmem:[%s3 + $0xf8] sm:$0xff]
  %v233 = vld [vmem:[%s3 + $0x100] sm:$0xff]
  %v234 = vld [vmem:[%s3 + $0x108] sm:$0xff]
  %v235 = vld [vmem:[%s3 + $0x110] sm:$0xff]
  %v236 = vld [vmem:[%s3 + $0x118] sm:$0xff]
  %v237 = vld [vmem:[%s3 + $0x120] sm:$0xff]
  %v238 = vld [vmem:[%s3 + $0x128] sm:$0xff]
  %v239 = vld [vmem:[%s3 + $0x130] sm:$0xff]
  %v240 = vld [vmem:[%s3 + $0x138] sm:$0xff]
  %v241 = vld [vmem:[%s3 + $0x140] sm:$0xff]
  %v242 = vld [vmem:[%s3 + $0x148] sm:$0xff]
  %v243 = vld [vmem:[%s3 + $0x150] sm:$0xff]
  %v244 = vld [vmem:[%s3 + $0x158] sm:$0xff]
  %v245 = vld [vmem:[%s3 + $0x160] sm:$0xff]
  %v246 = vld [vmem:[%s3 + $0x168] sm:$0xff]
  %v247 = vld [vmem:[%s3 + $0x170] sm:$0xff]
  %v248 = vld [vmem:[%s3 + $0x178] sm:$0xff]
  %v249 = vld [vmem:[%s4] sm:$0x1]
  %v251 = vlaneseq
  %v252 = vshrl.u32 %v251, 7
  %v253 = vsub.s32 0, %v252
  %v254 = vrot.slane %v249, %v253
  %256 = vmatprep.subr.mxu0 0.0
  %257 = vmatpush1.msra.mxu0 %v201
  %258 = vmatprep.subr.mxu0 0.0
  %259 = vmatpush1.msra.mxu0 %v202
  %260 = vmatprep.subr.mxu0 0.0
  %261 = vmatpush1.msra.mxu0 %v203
  %262 = vmatprep.subr.mxu0 0.0
  %263 = vmatpush1.msra.mxu0 %v204
  %264 = vmatprep.subr.mxu0 0.0
  %265 = vmatpush1.msra.mxu0 %v205
  %266 = vmatprep.subr.mxu0 0.0
  %267 = vmatpush1.msra.mxu0 %v206
  %268 = vmatprep.subr.mxu0 0.0
  %269 = vmatpush1.msra.mxu0 %v207
  %270 = vmatprep.subr.mxu0 0.0
  %271 = vmatpush1.msra.mxu0 %v208
  %272 = vmatprep.subr.mxu0 0.0
  %273 = vmatpush1.msra.mxu0 %v209
  %274 = vmatprep.subr.mxu0 0.0
  %275 = vmatpush1.msra.mxu0 %v210
  %276 = vmatprep.subr.mxu0 0.0
  %277 = vmatpush1.msra.mxu0 %v211
  %278 = vmatprep.subr.mxu0 0.0
  %279 = vmatpush1.msra.mxu0 %v212
  %280 = vmatprep.subr.mxu0 0.0
  %281 = vmatpush1.msra.mxu0 %v213
  %282 = vmatprep.subr.mxu0 0.0
  %283 = vmatpush1.msra.mxu0 %v214
  %284 = vmatprep.subr.mxu0 0.0
  %285 = vmatpush1.msra.mxu0 %v215
  %286 = vmatprep.subr.mxu0 0.0
  %287 = vmatpush1.msra.mxu0 %v216
  %288 = vmatprep.subr.mxu0 0.0
  %289 = vmatpush1.msra.mxu0 %v217
  %290 = vmatprep.subr.mxu0 0.0
  %291 = vmatpush1.msra.mxu0 %v218
  %292 = vmatprep.subr.mxu0 0.0
  %293 = vmatpush1.msra.mxu0 %v219
  %294 = vmatprep.subr.mxu0 0.0
  %295 = vmatpush1.msra.mxu0 %v220
  %296 = vmatprep.subr.mxu0 0.0
  %297 = vmatpush1.msra.mxu0 %v221
  %298 = vmatprep.subr.mxu0 0.0
  %299 = vmatpush1.msra.mxu0 %v222
  %300 = vmatprep.subr.mxu0 0.0
  %301 = vmatpush1.msra.mxu0 %v223
  %302 = vmatprep.subr.mxu0 0.0
  %303 = vmatpush1.msra.mxu0 %v224
  %304 = vmatprep.subr.mxu0 0.0
  %305 = vmatpush1.msra.mxu0 %v225
  %306 = vmatprep.subr.mxu0 0.0
  %307 = vmatpush1.msra.mxu0 %v226
  %308 = vmatprep.subr.mxu0 0.0
  %309 = vmatpush1.msra.mxu0 %v227
  %310 = vmatprep.subr.mxu0 0.0
  %311 = vmatpush1.msra.mxu0 %v228
  %312 = vmatprep.subr.mxu0 0.0
  %313 = vmatpush1.msra.mxu0 %v229
  %314 = vmatprep.subr.mxu0 0.0
  %315 = vmatpush1.msra.mxu0 %v230
  %316 = vmatprep.subr.mxu0 0.0
  %317 = vmatpush1.msra.mxu0 %v231
  %318 = vmatprep.subr.mxu0 0.0
  %319 = vmatpush1.msra.mxu0 %v232
  %320 = vmatprep.mubr.f32.mxu0 %v134
  %321 = vmatmul.mubr.f32.gmra.mrb[0].mxu0 %v180
  %v322 = vpop.f32.mrb[0].mxu0
  %v323 = vadd.f32 %v254, %v322
  %v324 = vpop.f32.mrb[0].mxu0
  %325 = vmatprep.mubr.f32.mxu0 %v135
  %326 = vmatmul.mubr.f32.gmra.mrb[0].mxu0 %v181
  %v327 = vpop.f32.mrb[0].mxu0
  %v328 = vadd.f32 %v254, %v327
  %v329 = vpop.f32.mrb[0].mxu0
  %330 = vdwg.mxu0
  %331 = vmatprep.subr.mxu0 0.0
  %332 = vmatpush1.msra.mxu0 %v233
  %333 = vmatprep.subr.mxu0 0.0
  %334 = vmatpush1.msra.mxu0 %v234
  %335 = vmatprep.subr.mxu0 0.0
  %336 = vmatpush1.msra.mxu0 %v235
  %337 = vmatprep.subr.mxu0 0.0
  %338 = vmatpush1.msra.mxu0 %v236
  %339 = vmatprep.subr.mxu0 0.0
  %340 = vmatpush1.msra.mxu0 %v237
  %341 = vmatprep.subr.mxu0 0.0
  %342 = vmatpush1.msra.mxu0 %v238
  %343 = vmatprep.subr.mxu0 0.0
  %344 = vmatpush1.msra.mxu0 %v239
  %345 = vmatprep.subr.mxu0 0.0
  %346 = vmatpush1.msra.mxu0 %v240
  %347 = vmatprep.subr.mxu0 0.0
  %348 = vmatpush1.msra.mxu0 %v241
  %349 = vmatprep.subr.mxu0 0.0
  %350 = vmatpush1.msra.mxu0 %v242
  %351 = vmatprep.subr.mxu0 0.0
  %352 = vmatpush1.msra.mxu0 %v243
  %353 = vmatprep.subr.mxu0 0.0
  %354 = vmatpush1.msra.mxu0 %v244
  %355 = vmatprep.subr.mxu0 0.0
  %356 = vmatpush1.msra.mxu0 %v245
  %357 = vmatprep.subr.mxu0 0.0
  %358 = vmatpush1.msra.mxu0 %v246
  %359 = vmatprep.subr.mxu0 0.0
  %360 = vmatpush1.msra.mxu0 %v247
  %361 = vmatprep.subr.mxu0 0.0
  %362 = vmatpush1.msra.mxu0 %v248
  %363 = vmatprep.subr.mxu0 0.0
  %364 = vmatpush1.msra.mxu0 0.0
  %365 = vmatprep.subr.mxu0 0.0
  %366 = vmatpush1.msra.mxu0 0.0
  %367 = vmatprep.subr.mxu0 0.0
  %368 = vmatpush1.msra.mxu0 0.0
  %369 = vmatprep.subr.mxu0 0.0
  %370 = vmatpush1.msra.mxu0 0.0
  %371 = vmatprep.subr.mxu0 0.0
  %372 = vmatpush1.msra.mxu0 0.0
  %373 = vmatprep.subr.mxu0 0.0
  %374 = vmatpush1.msra.mxu0 0.0
  %375 = vmatprep.subr.mxu0 0.0
  %376 = vmatpush1.msra.mxu0 0.0
  %377 = vmatprep.subr.mxu0 0.0
  %378 = vmatpush1.msra.mxu0 0.0
  %379 = vmatprep.subr.mxu0 0.0
  %380 = vmatpush1.msra.mxu0 0.0
  %381 = vmatprep.subr.mxu0 0.0
  %382 = vmatpush1.msra.mxu0 0.0
  %383 = vmatprep.subr.mxu0 0.0
  %384 = vmatpush1.msra.mxu0 0.0
  %385 = vmatprep.subr.mxu0 0.0
  %386 = vmatpush1.msra.mxu0 0.0
  %387 = vmatprep.subr.mxu0 0.0
  %388 = vmatpush1.msra.mxu0 0.0
  %389 = vmatprep.subr.mxu0 0.0
  %390 = vmatpush1.msra.mxu0 0.0
  %391 = vmatprep.subr.mxu0 0.0
  %392 = vmatpush1.msra.mxu0 0.0
  %393 = vmatprep.subr.mxu0 0.0
  %394 = vmatpush1.msra.mxu0 0.0
  %395 = vmatprep.mubr.f32.mxu0 0.0
  %396 = vmatmul.mubr.f32.gmra.mrb[0].mxu0 %v199
  %v397 = vpop.f32.mrb[0].mxu0
  %v398 = vadd.f32 %v323, %v397
  %v399 = vpop.f32.mrb[0].mxu0
  %400 = vmatprep.mubr.f32.mxu0 0.0
  %401 = vmatmul.mubr.f32.gmra.mrb[0].mxu0 %v200
  %v402 = vpop.f32.mrb[0].mxu0
  %v403 = vadd.f32 %v328, %v402
  %v404 = vpop.f32.mrb[0].mxu0
  %405 = vdwg.mxu0
  %v406 = vadd.f32 %v398, %v126
  %v407 = vadd.f32 %v403, %v132
  %v408 = vmax.f32 %v406, 0.0
  %v409 = vmax.f32 %v407, 0.0
  %410 = vst [vmem:[%s5] sm:$0xff] %v408
  %411 = vst [vmem:[%s5 + $0x8] sm:$0xff] %v409
  // Predicated region
  $region22: #{st_gcn_forward.1} parent=0 // pred_check
    _
  $region23: #{st_gcn_forward.1} parent=0 // pred_check_branch
    %413 = sbr.rel (0) target = $region25
  $region24: #{st_gcn_forward.1} parent=0 // pred_region
    _
  $region25: #{st_gcn_forward.1} parent=0 // pred_fallthru
    _
  // Predicated region
  $region26: #{st_gcn_forward.1} parent=0 // pred_check
    _
  $region27: #{st_gcn_forward.1} parent=0 // pred_check_branch
    %415 = sbr.rel (0) target = $region29
  $region28: #{st_gcn_forward.1} parent=0 // pred_region
    _
  $region29: #{st_gcn_forward.1} parent=0 // pred_fallthru
    _

</llo_original>
